<compile_context>
chip_gen: v5e
topology: v5e:2x2
jax: 0.10.0
libtpu: 0.0.40
codegen_flags: <defaults>
</compile_context>

<pallas_src>
import jax
import jax.numpy as jnp
from jax.experimental import pallas as pl
from jax.experimental.pallas import tpu as pltpu


def _quantile_loss_kernel(preds_ref, target_ref, q_ref, qm1_ref, out_ref):
    # out_ref is the (Q, tile_n) accumulator for this outer split; it stays
    # resident in VMEM across the inner reduction axis (index map ignores j).
    @pl.when(pl.program_id(1) == 0)
    def _():
        out_ref[...] = jnp.zeros_like(out_ref)

    errors = target_ref[...] - preds_ref[...]            # (Q, tile_n)
    # (Q, 1) q / (q-1) broadcast across lanes; pure VPU work, no reductions.
    out_ref[...] += jnp.maximum(q_ref[...] * errors, qm1_ref[...] * errors)


def quantile_loss(preds, target, quantiles, *, tile_n=2048, num_splits=2):
    """preds: (N, Q), target: (N,), quantiles: (Q,) -> scalar f32."""
    N, Q = preds.shape
    preds = preds.astype(jnp.float32)
    target = target.astype(jnp.float32)
    quantiles = quantiles.astype(jnp.float32)

    # Don't use a tile larger than (128-aligned) N itself.
    tile_n = min(tile_n, max(128, ((N + 127) // 128) * 128))

    # Lane-dense layout: N on the lane (last) axis.
    preds_t = preds.T                       # (Q, N)
    target2d = target.reshape(1, N)         # (1, N)

    # Zero-pad N up to tile_n * num_splits; zero rows add zero pinball loss.
    chunk = tile_n * num_splits
    n_pad = (-N) % chunk
    if n_pad:
        preds_t = jnp.pad(preds_t, ((0, 0), (0, n_pad)))
        target2d = jnp.pad(target2d, ((0, 0), (0, n_pad)))
    inner = (N + n_pad) // chunk            # reduction steps per split

    q2d = quantiles.reshape(Q, 1)
    qm1 = q2d - 1.0

    partial = pl.pallas_call(
        _quantile_loss_kernel,
        out_shape=jax.ShapeDtypeStruct((Q, num_splits * tile_n), jnp.float32),
        grid_spec=pltpu.PrefetchScalarGridSpec(
            num_scalar_prefetch=0,
            grid=(num_splits, inner),
            in_specs=[
                # preds tile: (Q, tile_n), walks along N
                pl.BlockSpec((Q, tile_n), lambda c, j: (0, c * inner + j)),
                # target tile: (1, tile_n), same N walk
                pl.BlockSpec((1, tile_n), lambda c, j: (0, c * inner + j)),
                # quantiles / (quantiles - 1): resident tiny blocks
                pl.BlockSpec((Q, 1), lambda c, j: (0, 0)),
                pl.BlockSpec((Q, 1), lambda c, j: (0, 0)),
            ],
            # Output block index depends only on the outer split -> it acts as
            # the VMEM-resident accumulator across the inner reduction axis.
            out_specs=pl.BlockSpec((Q, tile_n), lambda c, j: (0, c)),
        ),
        compiler_params=pltpu.CompilerParams(
            dimension_semantics=("parallel", "arbitrary"),
        ),
    )(preds_t, target2d, q2d, qm1)

    # Tiny final reduction + mean in JAX, using the true (un-padded) count.
    return jnp.sum(partial) / (N * Q)


def quantile_loss_ref(preds, target, quantiles):
    """Pure-JAX reference matching the PyTorch module exactly."""
    losses = []
    for i in range(quantiles.shape[0]):
        q = quantiles[i]
        errors = target - preds[:, i]
        losses.append(jnp.mean(jnp.maximum(q * errors, (q - 1.0) * errors)))
    return jnp.mean(jnp.stack(losses))


if __name__ == "__main__":
    key = jax.random.PRNGKey(0)

    # (128, 3): tile-aligned path; (200, 5): exercises the zero-padding path.
    for (N, Q) in [(128, 3), (200, 5)]:
        k1, k2, key = jax.random.split(key, 3)
        quantiles = jnp.linspace(0.1, 0.9, Q).astype(jnp.float32)
        preds = jax.random.normal(k1, (N, Q), dtype=jnp.float32)
        target = jax.random.normal(k2, (N,), dtype=jnp.float32)

        out = jax.block_until_ready(quantile_loss(preds, target, quantiles))
        ref = quantile_loss_ref(preds, target, quantiles)
        assert jnp.allclose(out, ref, atol=1e-5, rtol=1e-5), (N, Q, out, ref)

    print("KERNEL_OK")
</pallas_src>

<mosaic_0001>
module attributes {stable_mosaic.version = 11 : i64} {
  func.func @_quantile_loss_kernel(%arg0: i32, %arg1: i32, %arg2: memref<3x128xf32, #tpu.memory_space<vmem>>, %arg3: memref<1x128xf32, #tpu.memory_space<vmem>>, %arg4: memref<3x1xf32, #tpu.memory_space<vmem>>, %arg5: memref<3x1xf32, #tpu.memory_space<vmem>>, %arg6: memref<3x128xf32, #tpu.memory_space<vmem>>) attributes {dimension_semantics = [#tpu.dimension_semantics<parallel>, #tpu.dimension_semantics<arbitrary>], iteration_bounds = array<i64: 2, 1>, scalar_prefetch = 0 : i64, scratch_operands = 0 : i64, tpu.core_type = #tpu.core_type<tc>, window_params = [{transform_indices = @transform_0, window_bounds = array<i64: 3, 128>}, {transform_indices = @transform_1, window_bounds = array<i64: 1, 128>}, {pipeline_mode = #tpu.pipeline_mode<synchronous>, transform_indices = @transform_2, window_bounds = array<i64: 3, 1>}, {pipeline_mode = #tpu.pipeline_mode<synchronous>, transform_indices = @transform_3, window_bounds = array<i64: 3, 1>}, {transform_indices = @transform_4, window_bounds = array<i64: 3, 128>}]} {
    %c0_i32 = arith.constant 0 : i32
    %0 = arith.cmpi eq, %arg1, %c0_i32 : i32
    %1 = arith.extui %0 : i1 to i32
    %c0_i32_0 = arith.constant 0 : i32
    %2 = arith.cmpi ne, %1, %c0_i32_0 : i32
    scf.if %2 {
      %cst = arith.constant 0.000000e+00 : f32
      %17 = vector.broadcast %cst : f32 to vector<3x128xf32>
      %c0_12 = arith.constant 0 : index
      %c0_13 = arith.constant 0 : index
      %18 = vector.load %arg6[%c0_12, %c0_13] : memref<3x128xf32, #tpu.memory_space<vmem>>, vector<3x128xf32>
      tpu.vector_store %arg6[%c0_12, %c0_13], %17 {strides = array<i32>} : memref<3x128xf32, #tpu.memory_space<vmem>>, vector<3x128xf32>,
    } else {
    }
    %c0 = arith.constant 0 : index
    %c0_1 = arith.constant 0 : index
    %3 = vector.load %arg3[%c0, %c0_1] : memref<1x128xf32, #tpu.memory_space<vmem>>, vector<1x128xf32>
    %c0_2 = arith.constant 0 : index
    %c0_3 = arith.constant 0 : index
    %4 = vector.load %arg2[%c0_2, %c0_3] : memref<3x128xf32, #tpu.memory_space<vmem>>, vector<3x128xf32>
    %5 = vector.broadcast %3 : vector<1x128xf32> to vector<3x128xf32>
    %6 = arith.subf %5, %4 : vector<3x128xf32>
    %c0_4 = arith.constant 0 : index
    %c0_5 = arith.constant 0 : index
    %7 = vector.load %arg6[%c0_4, %c0_5] : memref<3x128xf32, #tpu.memory_space<vmem>>, vector<3x128xf32>
    %c0_6 = arith.constant 0 : index
    %c0_7 = arith.constant 0 : index
    %8 = vector.load %arg4[%c0_6, %c0_7] : memref<3x1xf32, #tpu.memory_space<vmem>>, vector<3x1xf32>
    %9 = vector.broadcast %8 : vector<3x1xf32> to vector<3x128xf32>
    %10 = arith.mulf %9, %6 : vector<3x128xf32>
    %c0_8 = arith.constant 0 : index
    %c0_9 = arith.constant 0 : index
    %11 = vector.load %arg5[%c0_8, %c0_9] : memref<3x1xf32, #tpu.memory_space<vmem>>, vector<3x1xf32>
    %12 = vector.broadcast %11 : vector<3x1xf32> to vector<3x128xf32>
    %13 = arith.mulf %12, %6 : vector<3x128xf32>
    %14 = arith.maximumf %10, %13 : vector<3x128xf32>
    %15 = arith.addf %7, %14 : vector<3x128xf32>
    %c0_10 = arith.constant 0 : index
    %c0_11 = arith.constant 0 : index
    %16 = vector.load %arg6[%c0_10, %c0_11] : memref<3x128xf32, #tpu.memory_space<vmem>>, vector<3x128xf32>
    tpu.vector_store %arg6[%c0_10, %c0_11], %15 {strides = array<i32>} : memref<3x128xf32, #tpu.memory_space<vmem>>, vector<3x128xf32>,
    return
  }
  func.func @transform_0(%arg0: i32, %arg1: i32) -> (i32, i32) {
    %c1_i32 = arith.constant 1 : i32
    %0 = arith.muli %arg0, %c1_i32 : i32
    %1 = arith.addi %0, %arg1 : i32
    %c0_i32 = arith.constant 0 : i32
    %c0_i32_0 = arith.constant 0 : i32
    return %c0_i32, %1 : i32, i32
  }
  func.func @transform_1(%arg0: i32, %arg1: i32) -> (i32, i32) {
    %c1_i32 = arith.constant 1 : i32
    %0 = arith.muli %arg0, %c1_i32 : i32
    %1 = arith.addi %0, %arg1 : i32
    %c0_i32 = arith.constant 0 : i32
    %c0_i32_0 = arith.constant 0 : i32
    return %c0_i32, %1 : i32, i32
  }
  func.func @transform_2(%arg0: i32, %arg1: i32) -> (i32, i32) {
    %c0_i32 = arith.constant 0 : i32
    %c0_i32_0 = arith.constant 0 : i32
    %c0_i32_1 = arith.constant 0 : i32
    return %c0_i32, %c0_i32_0 : i32, i32
  }
  func.func @transform_3(%arg0: i32, %arg1: i32) -> (i32, i32) {
    %c0_i32 = arith.constant 0 : i32
    %c0_i32_0 = arith.constant 0 : i32
    %c0_i32_1 = arith.constant 0 : i32
    return %c0_i32, %c0_i32_0 : i32, i32
  }
  func.func @transform_4(%arg0: i32, %arg1: i32) -> (i32, i32) {
    %c0_i32 = arith.constant 0 : i32
    %c0_i32_0 = arith.constant 0 : i32
    return %c0_i32, %arg0 : i32, i32
  }
}

</mosaic_0001>

<llo_original>
// kernel: tpu_custom_call.1
$region0: #{tpu_custom_call.1}
  #allocation0 [shape = 'u32[]', space=smem, size = 0x4, offset = 0x4, fixed_abs, tag = 'smem constant byte address 0x4 - core index']
  #allocation1 [shape = 'u32[72,128]{1,0:T(1,128)}', space=vmem, size = 0x9000, scoped, tag = 'internal scratch']
  %s0 = inlined_call_operand.vmem [shape: f32[3,256], index: 0, kind: input, shape index: {}]
  %s1 = inlined_call_operand.hbm [shape: f32[1,256], index: 1, kind: input, shape index: {}]
  %s2 = inlined_call_operand.vmem [shape: f32[3,1], index: 2, kind: input, shape index: {}]
  %s3 = inlined_call_operand.vmem [shape: f32[3,1], index: 3, kind: input, shape index: {}]
  %s4 = inlined_call_operand.hbm [shape: f32[3,256], index: 4, kind: output, shape index: {}]
  %s5 = sld [smem:[#allocation0]]
  $region57: #{tpu_custom_call.1} parent=0
    _
  %s7 = ssub.s32 1, %s5
  %s8 = scalar_select 0, %s7, %s5
  $region1: #{tpu_custom_call.1} parent=0
    #allocation2 [shape = 'u8[1024]{0}', space=vmem, size = 0x400, scoped, tag = 'input window, operand 1']
    #allocation3 [shape = 's32[2]{0}', space=sflag, size = 0x8, scoped, tag = 'scoped memory for tpu_custom_call.1']
    #allocation4 [shape = 's32[2]{0}', space=sflag, size = 0x8, scoped, tag = 'scoped memory for tpu_custom_call.1']
    #allocation5 [shape = 'u8[4096]{0}', space=vmem, size = 0x1000, scoped, tag = 'output window, operand 0']
    %9 = vsyncpa [#allocation3], 0
    %s10 = scalar_lea.sflag [#allocation3], 1
    %11 = vsyncpa %s10, 0
    %12 = vsyncpa [#allocation4], 0
    %s13 = scalar_lea.sflag [#allocation4], 1
    %14 = vsyncpa %s13, 0
    loop: start=0, step=1, limit=4
    $region2: #{tpu_custom_call.1} parent=1 // loop_pre_header
      _
    $region3: #{tpu_custom_call.1} parent=1 // loop_header
      %s16 = sphi 0, %s20
      %p17 = scmp.ge.s32.totalorder %s16, 4
      %s23 = sphi 0, %s35
      %s24 = sphi 0, %s31
      %s25 = sphi 0, %s23
      %s26 = sphi 0, %s24
      %s27 = sphi 0, %s25
      %s28 = sphi 0, %s26
      %s40 = sphi 0, %s42
      %s43 = sphi 0, %s40
      %s44 = sphi 0, %s43
      %s60 = sphi 0, %s44
      %s68 = sphi 0, %s70
      %s71 = sphi 0, %s68
      %s72 = sphi 0, %s71
      %s88 = sphi 0, %s72
      %s92 = sphi 0, %s92
      %s94 = sphi 0, %s92
      %s95 = sphi 0, %s94
      %s109 = sphi 0, %s95
      %s113 = sphi 0, %s113
      %s115 = sphi 0, %s113
      %s116 = sphi 0, %s115
      %s130 = sphi 0, %s116
      %s136 = sphi 0, %s138
      %s139 = sphi 0, %s136
      %s140 = sphi 0, %s139
      %s156 = sphi 0, %s140
    $region4: #{tpu_custom_call.1} parent=1 // loop_header_branch
      %19 = sbr.rel (%p17) target = $region8
    $region5: #{tpu_custom_call.1} parent=1 // loop_body
      %s21 = ssub.s32 %s16, 1
      %s22 = ssub.s32 %s16, 2
      %s29 = sadd.s32 1, %s24
      %p30 = scmp.ge.s32.totalorder %s29, 1
      %s31 = scalar_select %p30, 0, %s29
      %s32 = sadd.s32 1, %s23
      %s33 = scalar_select %p30, %s32, %s23
      %p34 = scmp.ge.s32.totalorder %s33, 2
      %s35 = scalar_select %p34, 0, %s33
      %s36 = sadd.s32 %s23, %s24
      %s37 = sadd.s32 %s35, %s31
      %s38 = ssub.s32 %s36, %s37
      %p39 = scmp.eq.s32.totalorder %s38, 0
      %s41 = sadd.s32 %s40, 1
      %s42 = scalar_select %p39, %s40, %s41
      %p45 = pneg %p39
      %p46 = scmp.eq.s32.totalorder %s16, 1
      %p47 = por %p45, %p46
      %p48 = scmp.ne.s32.totalorder %s40, %s43
      %p49 = scmp.eq.s32.totalorder %s16, 0
      %p50 = por %p48, %p49
      %p51 = scmp.ne.s32.totalorder %s40, %s43
      %p52 = scmp.eq.s32.totalorder %s21, 1
      %p53 = por %p51, %p52
      %p54 = scmp.ne.s32.totalorder %s43, %s44
      %p55 = scmp.eq.s32.totalorder %s21, 0
      %p56 = por %p54, %p55
      %p57 = scmp.ne.s32.totalorder %s43, %s44
      %p58 = scmp.eq.s32.totalorder %s22, 1
      %p59 = por %p57, %p58
      %p61 = scmp.ne.s32.totalorder %s44, %s60
      %p62 = scmp.eq.s32.totalorder %s22, 0
      %p63 = por %p61, %p62
      %s64 = sadd.s32 %s23, %s24
      %s65 = sadd.s32 %s35, %s31
      %s66 = ssub.s32 %s64, %s65
      %p67 = scmp.eq.s32.totalorder %s66, 0
      %s69 = sadd.s32 %s68, 1
      %s70 = scalar_select %p67, %s68, %s69
      %p73 = pneg %p67
      %p74 = scmp.eq.s32.totalorder %s16, 1
      %p75 = por %p73, %p74
      %p76 = scmp.ne.s32.totalorder %s68, %s71
      %p77 = scmp.eq.s32.totalorder %s16, 0
      %p78 = por %p76, %p77
      %p79 = scmp.ne.s32.totalorder %s68, %s71
      %p80 = scmp.eq.s32.totalorder %s21, 1
      %p81 = por %p79, %p80
      %p82 = scmp.ne.s32.totalorder %s71, %s72
      %p83 = scmp.eq.s32.totalorder %s21, 0
      %p84 = por %p82, %p83
      %p85 = scmp.ne.s32.totalorder %s71, %s72
      %p86 = scmp.eq.s32.totalorder %s22, 1
      %p87 = por %p85, %p86
      %p89 = scmp.ne.s32.totalorder %s72, %s88
      %p90 = scmp.eq.s32.totalorder %s22, 0
      %p91 = por %p89, %p90
      %s93 = sadd.s32 %s92, 1
      %p96 = scmp.eq.s32.totalorder %s16, 1
      %p97 = scmp.ne.s32.totalorder %s92, %s94
      %p98 = scmp.eq.s32.totalorder %s16, 0
      %p99 = por %p97, %p98
      %p100 = scmp.ne.s32.totalorder %s92, %s94
      %p101 = scmp.eq.s32.totalorder %s21, 1
      %p102 = por %p100, %p101
      %p103 = scmp.ne.s32.totalorder %s94, %s95
      %p104 = scmp.eq.s32.totalorder %s21, 0
      %p105 = por %p103, %p104
      %p106 = scmp.ne.s32.totalorder %s94, %s95
      %p107 = scmp.eq.s32.totalorder %s22, 1
      %p108 = por %p106, %p107
      %p110 = scmp.ne.s32.totalorder %s95, %s109
      %p111 = scmp.eq.s32.totalorder %s22, 0
      %p112 = por %p110, %p111
      %s114 = sadd.s32 %s113, 1
      %p117 = scmp.eq.s32.totalorder %s16, 1
      %p118 = scmp.ne.s32.totalorder %s113, %s115
      %p119 = scmp.eq.s32.totalorder %s16, 0
      %p120 = por %p118, %p119
      %p121 = scmp.ne.s32.totalorder %s113, %s115
      %p122 = scmp.eq.s32.totalorder %s21, 1
      %p123 = por %p121, %p122
      %p124 = scmp.ne.s32.totalorder %s115, %s116
      %p125 = scmp.eq.s32.totalorder %s21, 0
      %p126 = por %p124, %p125
      %p127 = scmp.ne.s32.totalorder %s115, %s116
      %p128 = scmp.eq.s32.totalorder %s22, 1
      %p129 = por %p127, %p128
      %p131 = scmp.ne.s32.totalorder %s116, %s130
      %p132 = scmp.eq.s32.totalorder %s22, 0
      %p133 = por %p131, %p132
      %s134 = ssub.s32 %s23, %s35
      %p135 = scmp.eq.s32.totalorder %s134, 0
      %s137 = sadd.s32 %s136, 1
      %s138 = scalar_select %p135, %s136, %s137
      %p141 = pneg %p135
      %p142 = scmp.eq.s32.totalorder %s16, 1
      %p143 = por %p141, %p142
      %p144 = scmp.ne.s32.totalorder %s136, %s139
      %p145 = scmp.eq.s32.totalorder %s16, 0
      %p146 = por %p144, %p145
      %p147 = scmp.ne.s32.totalorder %s136, %s139
      %p148 = scmp.eq.s32.totalorder %s21, 1
      %p149 = por %p147, %p148
      %p150 = scmp.ne.s32.totalorder %s139, %s140
      %p151 = scmp.eq.s32.totalorder %s21, 0
      %p152 = por %p150, %p151
      %p153 = scmp.ne.s32.totalorder %s139, %s140
      %p154 = scmp.eq.s32.totalorder %s22, 1
      %p155 = por %p153, %p154
      %p157 = scmp.ne.s32.totalorder %s140, %s156
      %p158 = scmp.eq.s32.totalorder %s22, 0
      %p159 = por %p157, %p158
      %p160 = scmp.le.s32.totalorder 1, %s16
      %p161 = scmp.lt.s32.totalorder %s16, 3
      %p162 = pnand %p160, %p161
      %p163 = pneg %p162
      // Predicated region
      $region9: #{tpu_custom_call.1} parent=5 // pred_check
        _
      $region10: #{tpu_custom_call.1} parent=5 // pred_check_branch
        %165 = sbr.rel (%p162) target = $region12
      $region11: #{tpu_custom_call.1} parent=5 // pred_region
        %s166 = ssub.s32 %s16, 1
        // Predicated region
        $region13: #{tpu_custom_call.1} parent=11 // pred_check
          %p167 = pneg %p105
        $region14: #{tpu_custom_call.1} parent=11 // pred_check_branch
          %169 = sbr.rel (%p167) target = $region16
        $region15: #{tpu_custom_call.1} parent=11 // pred_region
          _
        $region16: #{tpu_custom_call.1} parent=11 // pred_fallthru
          _
        // Predicated region
        $region17: #{tpu_custom_call.1} parent=11 // pred_check
          %p170 = pneg %p126
        $region18: #{tpu_custom_call.1} parent=11 // pred_check_branch
          %172 = sbr.rel (%p170) target = $region20
        $region19: #{tpu_custom_call.1} parent=11 // pred_region
          _
        $region20: #{tpu_custom_call.1} parent=11 // pred_fallthru
          _
      $region12: #{tpu_custom_call.1} parent=5 // pred_fallthru
        _
      %p173 = scmp.lt.s32.totalorder %s16, 2
      // Predicated region
      $region21: #{tpu_custom_call.1} parent=5 // pred_check
        %p174 = pneg %p173
      $region22: #{tpu_custom_call.1} parent=5 // pred_check_branch
        %176 = sbr.rel (%p174) target = $region24
      $region23: #{tpu_custom_call.1} parent=5 // pred_region
        // Predicated region
        $region25: #{tpu_custom_call.1} parent=23 // pred_check
          %p177 = pneg %p50
        $region26: #{tpu_custom_call.1} parent=23 // pred_check_branch
          %179 = sbr.rel (%p177) target = $region28
        $region27: #{tpu_custom_call.1} parent=23 // pred_region
          %s180 = sadd.s32 %s23, %s24
          %p181 = scmp.lt.s32.totalorder %s180, 1
          %s182 = scalar_select %p181, %s180, 1
          %s183 = smul.addr %s182, 4
          %s184 = scalar_lea.vmem %s0, %s183
          %s185 = sadd.s32 %s23, %s24
        $region28: #{tpu_custom_call.1} parent=23 // pred_fallthru
          _
        // Predicated region
        $region29: #{tpu_custom_call.1} parent=23 // pred_check
          %p186 = pneg %p78
        $region30: #{tpu_custom_call.1} parent=23 // pred_check_branch
          %188 = sbr.rel (%p186) target = $region32
        $region31: #{tpu_custom_call.1} parent=23 // pred_region
          %s189 = sand.u32 %s68, 1
          %s190 = scalar_lea.sflag [#allocation3], %s189
          %s191 = sand.u32 %s68, 1
          %s192 = scalar_lea.vmem [#allocation2], %s191
          %s193 = sadd.s32 %s23, %s24
          %195 = vsyncadd %s190, 0
          %s196 = scalar_lea.hbm %s1, %s193
          %s198 = sshll.u32 %s196, 4
          %s199 = int_to_ptr.hbm [resolvable:$true] %s198
          %s200 = sshll.u32 %s192, 4
          %s201 = int_to_ptr.vmem [resolvable:$true] %s200
          %203 = dma.hbm_to_vmem [thread:$0]  %s199, 16, %s201, %s190
        $region32: #{tpu_custom_call.1} parent=23 // pred_fallthru
          _
      $region24: #{tpu_custom_call.1} parent=5 // pred_fallthru
        _
      %p204 = scmp.le.s32.totalorder 1, %s16
      %p205 = scmp.lt.s32.totalorder %s16, 3
      %p206 = pnand %p204, %p205
      %p207 = pneg %p206
      // Predicated region
      $region33: #{tpu_custom_call.1} parent=5 // pred_check
        _
      $region34: #{tpu_custom_call.1} parent=5 // pred_check_branch
        %209 = sbr.rel (%p206) target = $region36
      $region35: #{tpu_custom_call.1} parent=5 // pred_region
        %s210 = ssub.s32 %s16, 1
        %s211 = sand.u32 %s71, 1
        %s212 = scalar_lea.sflag [#allocation3], %s211
        %s213 = sand.u32 %s71, 1
        %s214 = scalar_lea.vmem [#allocation2], %s213
        // Predicated region
        $region37: #{tpu_custom_call.1} parent=35 // pred_check
          %p215 = pneg %p84
        $region38: #{tpu_custom_call.1} parent=35 // pred_check_branch
          %217 = sbr.rel (%p215) target = $region40
        $region39: #{tpu_custom_call.1} parent=35 // pred_region
          %219 = dma.done %s212, 16
        $region40: #{tpu_custom_call.1} parent=35 // pred_fallthru
          _
        %s220 = sadd.s32 %s25, %s26
        %p221 = scmp.lt.s32.totalorder %s220, 1
        %s222 = scalar_select %p221, %s220, 1
        %s223 = smul.addr %s222, 4
        %s224 = scalar_lea.vmem %s0, %s223
        %p225 = pneg %p56
        %p226 = pneg %p53
        %s227 = sand.u32 %s71, 1
        %s228 = scalar_lea.sflag [#allocation3], %s227
        %s229 = sand.u32 %s71, 1
        %s230 = scalar_lea.vmem [#allocation2], %s229
        %p231 = pneg %p84
        %p232 = pneg %p81
        %p233 = pneg %p105
        %p234 = pneg %p102
        %p235 = pneg %p126
        %p236 = pneg %p123
        %p237 = pneg %p152
        %p238 = pneg %p149
        %s239 = sand.u32 %s139, 1
        %s240 = scalar_lea.sflag [#allocation4], %s239
        %s241 = sand.u32 %s139, 1
        %s242 = smul.addr %s241, 4
        %s243 = scalar_lea.vmem [#allocation5], %s242
        %s244 = sadd.s32 %s25, %s26
        %p245 = scmp.lt.s32.totalorder %s244, 1
        %s246 = scalar_select %p245, %s244, 1
        %s247 = smul.addr %s246, 4
        %s248 = scalar_lea.vmem %s0, %s247
        %s249 = sadd.s32 %s25, %s26
        %s250 = sadd.s32 %s25, %s26
        %p251 = scmp.eq.s32.totalorder %s26, 0
        // Predicated region
        $region41: #{tpu_custom_call.1} parent=35 // pred_check
          %p252 = pneg %p251
        $region42: #{tpu_custom_call.1} parent=35 // pred_check_branch
          %254 = sbr.rel (%p252) target = $region44
        $region43: #{tpu_custom_call.1} parent=35 // pred_region
          %255 = vst [vmem:[%s243] sm:$0x7] 0.0
        $region44: #{tpu_custom_call.1} parent=35 // pred_fallthru
          _
        %v256 = vld [vmem:[%s214] sm:$0x1]
        %v257 = vld [vmem:[%s248] sm:$0x7]
        %v259 = vperm.slane %v256, 0
        %v261 = vsub.f32 %v259, %v257
        %v262 = vld [vmem:[%s243] sm:$0x7]
        %v263 = vld [vmem:[%s2] sm:$0x7]
        %265 = vset.pattern.permute.xlu0 0
        %266 = vperm.xlu0 %265, %v263
        %v267 = vpop.permute.xlu0 %266
        %v269 = vmul.f32 %v267, %v261
        %v270 = vld [vmem:[%s3] sm:$0x7]
        %272 = vset.pattern.permute.xlu0 0
        %273 = vperm.xlu0 %272, %v270
        %v274 = vpop.permute.xlu0 %273
        %v276 = vmul.f32 %v274, %v261
        %v277 = vmax.f32 %v269, %v276
        %v278 = vadd.f32 %v262, %v277
        %279 = vst [vmem:[%s243] sm:$0x7] %v278
        %s280 = sand.u32 %s139, 1
        %s281 = scalar_lea.sflag [#allocation4], %s280
        %s282 = sand.u32 %s139, 1
        %s283 = smul.addr %s282, 4
        %s284 = scalar_lea.vmem [#allocation5], %s283
        // Predicated region
        $region45: #{tpu_custom_call.1} parent=35 // pred_check
          %p285 = pneg %p149
        $region46: #{tpu_custom_call.1} parent=35 // pred_check_branch
          %287 = sbr.rel (%p285) target = $region48
        $region47: #{tpu_custom_call.1} parent=35 // pred_region
          %289 = vsyncadd %s281, 0
          %s290 = smul.addr %s25, 4
          %s291 = scalar_lea.hbm %s4, %s290
          %s293 = sshll.u32 %s284, 4
          %s294 = int_to_ptr.vmem [resolvable:$true] %s293
          %s295 = sshll.u32 %s291, 4
          %s296 = int_to_ptr.hbm [resolvable:$true] %s295
          %298 = dma.vmem_to_hbm [thread:$0]  %s294, 64, %s296, %s281
        $region48: #{tpu_custom_call.1} parent=35 // pred_fallthru
          _
      $region36: #{tpu_custom_call.1} parent=5 // pred_fallthru
        _
      %p299 = scmp.le.s32.totalorder 2, %s16
      // Predicated region
      $region49: #{tpu_custom_call.1} parent=5 // pred_check
        %p300 = pneg %p299
      $region50: #{tpu_custom_call.1} parent=5 // pred_check_branch
        %302 = sbr.rel (%p300) target = $region52
      $region51: #{tpu_custom_call.1} parent=5 // pred_region
        %s303 = ssub.s32 %s16, 2
        // Predicated region
        $region53: #{tpu_custom_call.1} parent=51 // pred_check
          %p304 = pneg %p155
        $region54: #{tpu_custom_call.1} parent=51 // pred_check_branch
          %306 = sbr.rel (%p304) target = $region56
        $region55: #{tpu_custom_call.1} parent=51 // pred_region
          %s307 = sand.u32 %s140, 1
          %s308 = scalar_lea.sflag [#allocation4], %s307
          %s309 = sand.u32 %s140, 1
          %s310 = smul.addr %s309, 4
          %s311 = scalar_lea.vmem [#allocation5], %s310
          %313 = dma.done %s308, 64
        $region56: #{tpu_custom_call.1} parent=51 // pred_fallthru
          _
      $region52: #{tpu_custom_call.1} parent=5 // pred_fallthru
        _
    $region6: #{tpu_custom_call.1} parent=1 // loop_footer
      %s20 = sadd.s32 1, %s16
    $region7: #{tpu_custom_call.1} parent=1 // loop_footer_branch
      %15 = sbr.rel target = $region3
    $region8: #{tpu_custom_call.1} parent=1 // loop_exit
      _
    %314 = vsyncpa [#allocation3], 1
    %s315 = scalar_lea.sflag [#allocation3], 1
    %316 = vsyncpa %s315, 1
    %317 = vsyncpa [#allocation4], 1
    %s318 = scalar_lea.sflag [#allocation4], 1
    %319 = vsyncpa %s318, 1

</llo_original>
